<compile_context>
chip_gen: v5e
topology: v5e:2x2
jax: 0.10.0
libtpu: 0.0.40
codegen_flags: <defaults>
</compile_context>

<pallas_src>
import functools

import jax
import jax.numpy as jnp
from jax.experimental import pallas as pl
from jax.experimental.pallas import tpu as pltpu

LN_EPS = 1e-5                 # nn.LayerNorm default eps
TOKEN_PAD = 128               # pad tokens -> lane-dense [N, N] attention scores
VMEM_LIMIT_BYTES = 64 * 1024 * 1024
NEG_BIG = -1e30               # finite "minus infinity" for key-padding mask


# ----------------------------------------------------------------------------
# Kernel bodies
# ----------------------------------------------------------------------------
def _layer_norm(x, w, b):
    # x: [N, E] f32 ; stats in f32 (biased variance, matches nn.LayerNorm)
    mu = jnp.mean(x, axis=-1, keepdims=True)
    var = jnp.mean(jnp.square(x - mu), axis=-1, keepdims=True)
    return (x - mu) * jax.lax.rsqrt(var + LN_EPS) * w + b


def _block_body(x, w, num_heads, n_valid):
    """One encoder block: x + proj(attn(LN1(x))) then x + mlp(LN2(x))."""
    (ln1_w, ln1_b, wq, wk, wv, bq, bk, bv, projw, projb,
     ln2_w, ln2_b, fc1w, fc1b, fc2w, fc2b) = w
    n_tok, e = x.shape
    dh = e // num_heads
    scale = dh ** -0.5

    # ---- attention branch ----
    h = _layer_norm(x, ln1_w[0], ln1_b[0]).astype(jnp.bfloat16)   # [N, E]

    # Static key-padding mask (only materialized when tokens were padded).
    if n_valid < n_tok:
        key_ok = jax.lax.broadcasted_iota(jnp.int32, (1, n_tok), 1) < n_valid
        key_bias = jnp.where(key_ok, 0.0, NEG_BIG).astype(jnp.float32)  # [1, N]
    else:
        key_bias = None

    attn = jnp.zeros((n_tok, e), jnp.float32)
    for hd in range(num_heads):
        # per-head QKV: full-E (lane-dense) contraction, weights pre-split in
        # the wrapper so no sub-lane activation slicing happens here.
        qh = jnp.dot(h, wq[hd], preferred_element_type=jnp.float32) + bq[hd]
        kh = jnp.dot(h, wk[hd], preferred_element_type=jnp.float32) + bk[hd]
        vh = jnp.dot(h, wv[hd], preferred_element_type=jnp.float32) + bv[hd]

        # scores = q @ k^T * scale   (contract head dim) -> [N, N] lane-dense
        s = jax.lax.dot_general(
            qh.astype(jnp.bfloat16), kh.astype(jnp.bfloat16),
            (((1,), (1,)), ((), ())),
            preferred_element_type=jnp.float32) * scale
        if key_bias is not None:
            s = s + key_bias                        # mask padded keys (finite)
        s = s - jnp.max(s, axis=-1, keepdims=True)
        p = jnp.exp(s)
        # EUP approximate reciprocal for the softmax denominator.
        p = p * pl.reciprocal(jnp.sum(p, axis=-1, keepdims=True), approx=True)

        oh = jnp.dot(p.astype(jnp.bfloat16), vh.astype(jnp.bfloat16),
                     preferred_element_type=jnp.float32)          # [N, Dh]
        # accumulate the output projection per head (no concatenate)
        attn = attn + jnp.dot(oh.astype(jnp.bfloat16), projw[hd],
                              preferred_element_type=jnp.float32) # [N, E]
    x = x + attn + projb[0]          # drop_path / proj_drop: identity (eval)

    # ---- MLP branch ----
    h2 = _layer_norm(x, ln2_w[0], ln2_b[0]).astype(jnp.bfloat16)
    h2 = jnp.dot(h2, fc1w[...], preferred_element_type=jnp.float32) + fc1b[0]
    h2 = jax.nn.gelu(h2, approximate=False)         # exact erf GELU (nn.GELU)
    h2 = jnp.dot(h2.astype(jnp.bfloat16), fc2w[...],
                 preferred_element_type=jnp.float32) + fc2b[0]
    return x + h2                    # drop_path: identity (eval)


def _block_kernel(x_ref, *refs, num_heads, n_valid):
    o_ref = refs[-1]
    o_ref[0] = _block_body(x_ref[0], refs[:-1], num_heads, n_valid)


def _block_final_kernel(x_ref, *refs, num_heads, n_valid):
    # refs: 16 block weights, norm_w, norm_b, hidden_out_ref, norm_out_ref
    lnf_w, lnf_b, h_ref, o_ref = refs[-4], refs[-3], refs[-2], refs[-1]
    y = _block_body(x_ref[0], refs[:-4], num_heads, n_valid)
    h_ref[0] = y                                   # pre-norm hidden state
    o_ref[0] = _layer_norm(y, lnf_w[0], lnf_b[0])  # fused final LayerNorm


def _patch_embed_kernel(patches_ref, w_ref, b_ref, pos_ref, o_ref):
    # patches_ref: [1, N, P] f32  w_ref: [P, E] bf16  b_ref: [1, E]  pos: [N, E]
    p = patches_ref[0].astype(jnp.bfloat16)
    y = jnp.dot(p, w_ref[...], preferred_element_type=jnp.float32)
    o_ref[0] = y + b_ref[0] + pos_ref[...]


# ----------------------------------------------------------------------------
# Wrappers
# ----------------------------------------------------------------------------
def _full(a):
    nd = a.ndim
    return pl.BlockSpec(a.shape, lambda b: (0,) * nd)


_BLOCK_KEYS = ("ln1_w", "ln1_b", "wq", "wk", "wv", "bq", "bk", "bv",
               "proj_w", "proj_b", "ln2_w", "ln2_b",
               "fc1_w", "fc1_b", "fc2_w", "fc2_b")


def _block_args(p):
    return tuple(p[k] for k in _BLOCK_KEYS)


def patch_embed(patches, w, b, pos):
    B, N, P = patches.shape
    E = w.shape[1]
    return pl.pallas_call(
        _patch_embed_kernel,
        out_shape=jax.ShapeDtypeStruct((B, N, E), jnp.float32),
        grid=(B,),
        in_specs=[pl.BlockSpec((1, N, P), lambda b: (b, 0, 0)),
                  _full(w), _full(b), _full(pos)],
        out_specs=pl.BlockSpec((1, N, E), lambda b: (b, 0, 0)),
        compiler_params=pltpu.CompilerParams(
            dimension_semantics=("parallel",),
            vmem_limit_bytes=VMEM_LIMIT_BYTES),
    )(patches, w, b, pos)


def vit_block(x, p, *, num_heads, n_valid):
    B, N, E = x.shape
    w = _block_args(p)
    kern = functools.partial(_block_kernel, num_heads=num_heads, n_valid=n_valid)
    return pl.pallas_call(
        kern,
        out_shape=jax.ShapeDtypeStruct((B, N, E), jnp.float32),
        grid=(B,),
        in_specs=[pl.BlockSpec((1, N, E), lambda b: (b, 0, 0))]
                 + [_full(a) for a in w],
        out_specs=pl.BlockSpec((1, N, E), lambda b: (b, 0, 0)),
        compiler_params=pltpu.CompilerParams(
            dimension_semantics=("parallel",),
            vmem_limit_bytes=VMEM_LIMIT_BYTES),
    )(x, *w)


def vit_block_final(x, p, norm_w, norm_b, *, num_heads, n_valid):
    """Last encoder block with the final LayerNorm fused in (two outputs)."""
    B, N, E = x.shape
    w = _block_args(p)
    kern = functools.partial(_block_final_kernel, num_heads=num_heads,
                             n_valid=n_valid)
    hidden, out = pl.pallas_call(
        kern,
        out_shape=(jax.ShapeDtypeStruct((B, N, E), jnp.float32),
                   jax.ShapeDtypeStruct((B, N, E), jnp.float32)),
        grid=(B,),
        in_specs=[pl.BlockSpec((1, N, E), lambda b: (b, 0, 0))]
                 + [_full(a) for a in w] + [_full(norm_w), _full(norm_b)],
        out_specs=(pl.BlockSpec((1, N, E), lambda b: (b, 0, 0)),
                   pl.BlockSpec((1, N, E), lambda b: (b, 0, 0))),
        compiler_params=pltpu.CompilerParams(
            dimension_semantics=("parallel",),
            vmem_limit_bytes=VMEM_LIMIT_BYTES),
    )(x, *w, norm_w, norm_b)
    return hidden, out


def patchify(x, patch_size):
    """NCHW -> [B, num_patches, C*p*p]; patch-vector order = (c, ph, pw),
    matching Conv2d(kernel=stride=p) + flatten(2).transpose(1, 2)."""
    B, C, H, W = x.shape
    p = patch_size
    gh, gw = H // p, W // p
    x = x.reshape(B, C, gh, p, gw, p)
    x = x.transpose(0, 2, 4, 1, 3, 5)                   # [B, gh, gw, C, p, p]
    return x.reshape(B, gh * gw, C * p * p)


def _round_up(n, m):
    return ((n + m - 1) // m) * m


def vit_forward(x, params, *, num_heads, patch_size):
    patches = patchify(x, patch_size)                   # [B, N, C*p*p]
    B, N, _ = patches.shape
    n_pad = _round_up(N, TOKEN_PAD)                     # lane-dense token count
    pos = params["pos_embed"]
    if n_pad != N:
        patches = jnp.pad(patches, ((0, 0), (0, n_pad - N), (0, 0)))
        pos = jnp.pad(pos, ((0, n_pad - N), (0, 0)))

    h = patch_embed(patches, params["patch_w"], params["patch_b"], pos)
    # pos_drop: nn.Dropout in eval mode -> identity

    hidden_states_out = []
    blocks = params["blocks"]
    out = None
    for i, bp in enumerate(blocks):
        if i == len(blocks) - 1:
            h, out = vit_block_final(h, bp, params["norm_w"], params["norm_b"],
                                     num_heads=num_heads, n_valid=N)
        else:
            h = vit_block(h, bp, num_heads=num_heads, n_valid=N)
        hidden_states_out.append(h[:, :N] if n_pad != N else h)
    out = out[:, :N] if n_pad != N else out
    return out, hidden_states_out


# ----------------------------------------------------------------------------
# Deterministic parameter construction (synthetic, matches module shapes).
# Weights are bf16 (matmul operands); biases / LayerNorm params / pos_embed f32.
# ----------------------------------------------------------------------------
def init_params(key, *, in_chans, patch_size, embed_dim, depth, num_heads,
                mlp_ratio, num_patches):
    P = in_chans * patch_size * patch_size
    Hmlp = int(embed_dim * mlp_ratio)
    Dh = embed_dim // num_heads
    ks = jax.random.split(key, 2 + depth)

    def normal(k, shape, dtype=jnp.bfloat16):
        return (0.02 * jax.random.normal(k, shape)).astype(dtype)

    params = {
        # Conv2d(kernel=stride=patch) weight [E, C, p, p] flattened -> [C*p*p, E]
        "patch_w": normal(ks[0], (P, embed_dim)),
        "patch_b": jnp.zeros((1, embed_dim), jnp.float32),
        "pos_embed": normal(ks[1], (num_patches, embed_dim), jnp.float32),
        "norm_w": jnp.ones((1, embed_dim), jnp.float32),
        "norm_b": jnp.zeros((1, embed_dim), jnp.float32),
        "blocks": [],
    }
    for d in range(depth):
        kb = jax.random.split(ks[2 + d], 6)
        params["blocks"].append({
            "ln1_w": jnp.ones((1, embed_dim), jnp.float32),
            "ln1_b": jnp.zeros((1, embed_dim), jnp.float32),
            # qkv Linear(E, 3E, bias=True), pre-split per head, [in, out] order:
            #   wq[h] == qkv.weight[h*Dh:(h+1)*Dh, :].T  (and k/v from the
            #   E:2E / 2E:3E row blocks), bq[h] == qkv.bias[h*Dh:(h+1)*Dh].
            "wq": normal(kb[0], (num_heads, embed_dim, Dh)),
            "wk": normal(kb[1], (num_heads, embed_dim, Dh)),
            "wv": normal(kb[2], (num_heads, embed_dim, Dh)),
            "bq": jnp.zeros((num_heads, 1, Dh), jnp.float32),
            "bk": jnp.zeros((num_heads, 1, Dh), jnp.float32),
            "bv": jnp.zeros((num_heads, 1, Dh), jnp.float32),
            # proj Linear(E, E): per-head input rows, proj_w[h] == proj.weight[:, h*Dh:(h+1)*Dh].T
            "proj_w": normal(kb[3], (num_heads, Dh, embed_dim)),
            "proj_b": jnp.zeros((1, embed_dim), jnp.float32),
            "ln2_w": jnp.ones((1, embed_dim), jnp.float32),
            "ln2_b": jnp.zeros((1, embed_dim), jnp.float32),
            # MLP Linear weights stored pre-transposed as [in, out]
            "fc1_w": normal(kb[4], (embed_dim, Hmlp)),
            "fc1_b": jnp.zeros((1, Hmlp), jnp.float32),
            "fc2_w": normal(kb[5], (Hmlp, embed_dim)),
            "fc2_b": jnp.zeros((1, embed_dim), jnp.float32),
        })
    return params


# ----------------------------------------------------------------------------
if __name__ == "__main__":
    # Small ViT config consistent with the module's __init__ shapes.
    B, C, IMG, PATCH = 2, 4, 32, 4
    EMBED, DEPTH, HEADS, MLP_RATIO = 256, 2, 4, 4.0
    NUM_PATCHES = (IMG // PATCH) ** 2            # 64 tokens (padded to 128 inside)

    key = jax.random.PRNGKey(0)
    kx, kp = jax.random.split(key)
    x = jax.random.normal(kx, (B, C, IMG, IMG), dtype=jnp.float32)   # NCHW

    params = init_params(kp, in_chans=C, patch_size=PATCH, embed_dim=EMBED,
                         depth=DEPTH, num_heads=HEADS, mlp_ratio=MLP_RATIO,
                         num_patches=NUM_PATCHES)

    out, hidden = vit_forward(x, params, num_heads=HEADS, patch_size=PATCH)
    out = jax.block_until_ready(out)
    hidden = [jax.block_until_ready(h) for h in hidden]

    assert out.shape == (B, NUM_PATCHES, EMBED)
    assert len(hidden) == DEPTH and all(h.shape == out.shape for h in hidden)
    assert bool(jnp.all(jnp.isfinite(out)))
    print("KERNEL_OK")
</pallas_src>

<mosaic_0001>
module attributes {stable_mosaic.version = 11 : i64} {
  func.func @_patch_embed_kernel(%arg0: i32, %arg1: memref<1x128x64xf32, #tpu.memory_space<vmem>>, %arg2: memref<64x256xbf16, #tpu.memory_space<vmem>>, %arg3: memref<1x256xf32, #tpu.memory_space<vmem>>, %arg4: memref<128x256xf32, #tpu.memory_space<vmem>>, %arg5: memref<1x128x256xf32, #tpu.memory_space<vmem>>) attributes {dimension_semantics = [#tpu.dimension_semantics<parallel>], iteration_bounds = array<i64: 2>, scalar_prefetch = 0 : i64, scratch_operands = 0 : i64, tpu.core_type = #tpu.core_type<tc>, window_params = [{transform_indices = @transform_0, window_bounds = array<i64: 1, 128, 64>}, {pipeline_mode = #tpu.pipeline_mode<synchronous>, transform_indices = @transform_1, window_bounds = array<i64: 64, 256>}, {pipeline_mode = #tpu.pipeline_mode<synchronous>, transform_indices = @transform_2, window_bounds = array<i64: 1, 256>}, {pipeline_mode = #tpu.pipeline_mode<synchronous>, transform_indices = @transform_3, window_bounds = array<i64: 128, 256>}, {transform_indices = @transform_4, window_bounds = array<i64: 1, 128, 256>}]} {
    %c0 = arith.constant 0 : index
    %c0_0 = arith.constant 0 : index
    %c0_1 = arith.constant 0 : index
    %0 = vector.load %arg1[%c0, %c0_0, %c0_1] : memref<1x128x64xf32, #tpu.memory_space<vmem>>, vector<1x128x64xf32>
    %1 = vector.shape_cast %0 : vector<1x128x64xf32> to vector<128x64xf32>
    %2 = arith.truncf %1 : vector<128x64xf32> to vector<128x64xbf16>
    %c0_2 = arith.constant 0 : index
    %c0_3 = arith.constant 0 : index
    %3 = vector.load %arg2[%c0_2, %c0_3] : memref<64x256xbf16, #tpu.memory_space<vmem>>, vector<64x256xbf16>
    %cst = arith.constant dense<0.000000e+00> : vector<128x256xf32>
    %4 = tpu.matmul %2, %3, %cst {dimension_numbers = #tpu.dot_dimension_numbers<[1], [0], [0], [1], [0, 0, 1, 1], [], []>} : vector<128x64xbf16>, vector<64x256xbf16>, vector<128x256xf32> -> vector<128x256xf32>
    %c0_4 = arith.constant 0 : index
    %c0_5 = arith.constant 0 : index
    %5 = vector.load %arg3[%c0_4, %c0_5] : memref<1x256xf32, #tpu.memory_space<vmem>>, vector<1x256xf32>
    %6 = vector.shape_cast %5 : vector<1x256xf32> to vector<256xf32>
    %7 = vector.shape_cast %6 : vector<256xf32> to vector<1x256xf32>
    %8 = vector.broadcast %7 : vector<1x256xf32> to vector<128x256xf32>
    %9 = arith.addf %4, %8 : vector<128x256xf32>
    %c0_6 = arith.constant 0 : index
    %c0_7 = arith.constant 0 : index
    %10 = vector.load %arg4[%c0_6, %c0_7] : memref<128x256xf32, #tpu.memory_space<vmem>>, vector<128x256xf32>
    %11 = arith.addf %9, %10 : vector<128x256xf32>
    %c0_8 = arith.constant 0 : index
    %c0_9 = arith.constant 0 : index
    %c0_10 = arith.constant 0 : index
    %12 = vector.load %arg5[%c0_8, %c0_9, %c0_10] : memref<1x128x256xf32, #tpu.memory_space<vmem>>, vector<1x128x256xf32>
    %13 = vector.shape_cast %12 : vector<1x128x256xf32> to vector<128x256xf32>
    %14 = vector.shape_cast %11 : vector<128x256xf32> to vector<1x128x256xf32>
    tpu.vector_store %arg5[%c0_8, %c0_9, %c0_10], %14 {strides = array<i32>} : memref<1x128x256xf32, #tpu.memory_space<vmem>>, vector<1x128x256xf32>,
    return
  }
  func.func @transform_0(%arg0: i32) -> (i32, i32, i32) {
    %c0_i32 = arith.constant 0 : i32
    %c0_i32_0 = arith.constant 0 : i32
    %c0_i32_1 = arith.constant 0 : i32
    return %arg0, %c0_i32, %c0_i32_0 : i32, i32, i32
  }
  func.func @transform_1(%arg0: i32) -> (i32, i32) {
    %c0_i32 = arith.constant 0 : i32
    %c0_i32_0 = arith.constant 0 : i32
    %c0_i32_1 = arith.constant 0 : i32
    return %c0_i32, %c0_i32_0 : i32, i32
  }
  func.func @transform_2(%arg0: i32) -> (i32, i32) {
    %c0_i32 = arith.constant 0 : i32
    %c0_i32_0 = arith.constant 0 : i32
    %c0_i32_1 = arith.constant 0 : i32
    return %c0_i32, %c0_i32_0 : i32, i32
  }
  func.func @transform_3(%arg0: i32) -> (i32, i32) {
    %c0_i32 = arith.constant 0 : i32
    %c0_i32_0 = arith.constant 0 : i32
    %c0_i32_1 = arith.constant 0 : i32
    return %c0_i32, %c0_i32_0 : i32, i32
  }
  func.func @transform_4(%arg0: i32) -> (i32, i32, i32) {
    %c0_i32 = arith.constant 0 : i32
    %c0_i32_0 = arith.constant 0 : i32
    %c0_i32_1 = arith.constant 0 : i32
    return %arg0, %c0_i32, %c0_i32_0 : i32, i32, i32
  }
}

</mosaic_0001>

<llo_original>
// kernel: tpu_custom_call.1
$region0: #{tpu_custom_call.1}
  #allocation0 [shape = 'u32[]', space=smem, size = 0x4, offset = 0x4, fixed_abs, tag = 'smem constant byte address 0x4 - core index']
  #allocation1 [shape = 'u32[72,128]{1,0:T(1,128)}', space=vmem, size = 0x9000, scoped, tag = 'internal scratch']
  %s0 = inlined_call_operand.vmem [shape: f32[2,128,64], index: 0, kind: input, shape index: {}]
  %s1 = inlined_call_operand.vmem [shape: bf16[64,256], index: 1, kind: input, shape index: {}]
  %s2 = inlined_call_operand.vmem [shape: f32[1,256], index: 2, kind: input, shape index: {}]
  %s3 = inlined_call_operand.vmem [shape: f32[128,256], index: 3, kind: input, shape index: {}]
  %s4 = inlined_call_operand.hbm [shape: f32[2,128,256], index: 4, kind: output, shape index: {}]
  %s5 = sld [smem:[#allocation0]]
  $region49: #{tpu_custom_call.1} parent=0
    _
  %s7 = ssub.s32 1, %s5
  %s8 = scalar_select 0, %s7, %s5
  $region1: #{tpu_custom_call.1} parent=0
    #allocation2 [shape = 'u8[262144]{0}', space=vmem, size = 0x40000, scoped, tag = 'output window, operand 0']
    #allocation3 [shape = 's32[2]{0}', space=sflag, size = 0x8, scoped, tag = 'scoped memory for tpu_custom_call.1']
    %9 = vsyncpa [#allocation3], 0
    %s10 = scalar_lea.sflag [#allocation3], 1
    %11 = vsyncpa %s10, 0
    loop: start=0, step=1, limit=4
    $region2: #{tpu_custom_call.1} parent=1 // loop_pre_header
      _
    $region3: #{tpu_custom_call.1} parent=1 // loop_header
      %s13 = sphi 0, %s17
      %p14 = scmp.ge.s32.totalorder %s13, 4
      %s23 = sphi 0, %s25
      %s26 = sphi 0, %s23
      %s27 = sphi 0, %s26
      %s43 = sphi 0, %s27
      %s47 = sphi 0, %s47
      %s49 = sphi 0, %s47
      %s50 = sphi 0, %s49
      %s64 = sphi 0, %s50
      %s68 = sphi 0, %s68
      %s70 = sphi 0, %s68
      %s71 = sphi 0, %s70
      %s85 = sphi 0, %s71
      %s89 = sphi 0, %s89
      %s91 = sphi 0, %s89
      %s92 = sphi 0, %s91
      %s106 = sphi 0, %s92
      %s112 = sphi 0, %s114
      %s115 = sphi 0, %s112
      %s116 = sphi 0, %s115
      %s132 = sphi 0, %s116
    $region4: #{tpu_custom_call.1} parent=1 // loop_header_branch
      %16 = sbr.rel (%p14) target = $region8
    $region5: #{tpu_custom_call.1} parent=1 // loop_body
      %s18 = ssub.s32 %s13, 1
      %s19 = ssub.s32 %s13, 2
      %s20 = sadd.s32 %s13, 1
      %s21 = ssub.s32 %s13, %s20
      %p22 = scmp.eq.s32.totalorder %s21, 0
      %s24 = sadd.s32 %s23, 1
      %s25 = scalar_select %p22, %s23, %s24
      %p28 = pneg %p22
      %p29 = scmp.eq.s32.totalorder %s13, 1
      %p30 = por %p28, %p29
      %p31 = scmp.ne.s32.totalorder %s23, %s26
      %p32 = scmp.eq.s32.totalorder %s13, 0
      %p33 = por %p31, %p32
      %p34 = scmp.ne.s32.totalorder %s23, %s26
      %p35 = scmp.eq.s32.totalorder %s18, 1
      %p36 = por %p34, %p35
      %p37 = scmp.ne.s32.totalorder %s26, %s27
      %p38 = scmp.eq.s32.totalorder %s18, 0
      %p39 = por %p37, %p38
      %p40 = scmp.ne.s32.totalorder %s26, %s27
      %p41 = scmp.eq.s32.totalorder %s19, 1
      %p42 = por %p40, %p41
      %p44 = scmp.ne.s32.totalorder %s27, %s43
      %p45 = scmp.eq.s32.totalorder %s19, 0
      %p46 = por %p44, %p45
      %s48 = sadd.s32 %s47, 1
      %p51 = scmp.eq.s32.totalorder %s13, 1
      %p52 = scmp.ne.s32.totalorder %s47, %s49
      %p53 = scmp.eq.s32.totalorder %s13, 0
      %p54 = por %p52, %p53
      %p55 = scmp.ne.s32.totalorder %s47, %s49
      %p56 = scmp.eq.s32.totalorder %s18, 1
      %p57 = por %p55, %p56
      %p58 = scmp.ne.s32.totalorder %s49, %s50
      %p59 = scmp.eq.s32.totalorder %s18, 0
      %p60 = por %p58, %p59
      %p61 = scmp.ne.s32.totalorder %s49, %s50
      %p62 = scmp.eq.s32.totalorder %s19, 1
      %p63 = por %p61, %p62
      %p65 = scmp.ne.s32.totalorder %s50, %s64
      %p66 = scmp.eq.s32.totalorder %s19, 0
      %p67 = por %p65, %p66
      %s69 = sadd.s32 %s68, 1
      %p72 = scmp.eq.s32.totalorder %s13, 1
      %p73 = scmp.ne.s32.totalorder %s68, %s70
      %p74 = scmp.eq.s32.totalorder %s13, 0
      %p75 = por %p73, %p74
      %p76 = scmp.ne.s32.totalorder %s68, %s70
      %p77 = scmp.eq.s32.totalorder %s18, 1
      %p78 = por %p76, %p77
      %p79 = scmp.ne.s32.totalorder %s70, %s71
      %p80 = scmp.eq.s32.totalorder %s18, 0
      %p81 = por %p79, %p80
      %p82 = scmp.ne.s32.totalorder %s70, %s71
      %p83 = scmp.eq.s32.totalorder %s19, 1
      %p84 = por %p82, %p83
      %p86 = scmp.ne.s32.totalorder %s71, %s85
      %p87 = scmp.eq.s32.totalorder %s19, 0
      %p88 = por %p86, %p87
      %s90 = sadd.s32 %s89, 1
      %p93 = scmp.eq.s32.totalorder %s13, 1
      %p94 = scmp.ne.s32.totalorder %s89, %s91
      %p95 = scmp.eq.s32.totalorder %s13, 0
      %p96 = por %p94, %p95
      %p97 = scmp.ne.s32.totalorder %s89, %s91
      %p98 = scmp.eq.s32.totalorder %s18, 1
      %p99 = por %p97, %p98
      %p100 = scmp.ne.s32.totalorder %s91, %s92
      %p101 = scmp.eq.s32.totalorder %s18, 0
      %p102 = por %p100, %p101
      %p103 = scmp.ne.s32.totalorder %s91, %s92
      %p104 = scmp.eq.s32.totalorder %s19, 1
      %p105 = por %p103, %p104
      %p107 = scmp.ne.s32.totalorder %s92, %s106
      %p108 = scmp.eq.s32.totalorder %s19, 0
      %p109 = por %p107, %p108
      %s110 = ssub.s32 %s13, %s20
      %p111 = scmp.eq.s32.totalorder %s110, 0
      %s113 = sadd.s32 %s112, 1
      %s114 = scalar_select %p111, %s112, %s113
      %p117 = pneg %p111
      %p118 = scmp.eq.s32.totalorder %s13, 1
      %p119 = por %p117, %p118
      %p120 = scmp.ne.s32.totalorder %s112, %s115
      %p121 = scmp.eq.s32.totalorder %s13, 0
      %p122 = por %p120, %p121
      %p123 = scmp.ne.s32.totalorder %s112, %s115
      %p124 = scmp.eq.s32.totalorder %s18, 1
      %p125 = por %p123, %p124
      %p126 = scmp.ne.s32.totalorder %s115, %s116
      %p127 = scmp.eq.s32.totalorder %s18, 0
      %p128 = por %p126, %p127
      %p129 = scmp.ne.s32.totalorder %s115, %s116
      %p130 = scmp.eq.s32.totalorder %s19, 1
      %p131 = por %p129, %p130
      %p133 = scmp.ne.s32.totalorder %s116, %s132
      %p134 = scmp.eq.s32.totalorder %s19, 0
      %p135 = por %p133, %p134
      %p136 = scmp.le.s32.totalorder 1, %s13
      %p137 = scmp.lt.s32.totalorder %s13, 3
      %p138 = pnand %p136, %p137
      %p139 = pneg %p138
      // Predicated region
      $region9: #{tpu_custom_call.1} parent=5 // pred_check
        _
      $region10: #{tpu_custom_call.1} parent=5 // pred_check_branch
        %141 = sbr.rel (%p138) target = $region12
      $region11: #{tpu_custom_call.1} parent=5 // pred_region
        %s142 = ssub.s32 %s13, 1
        // Predicated region
        $region13: #{tpu_custom_call.1} parent=11 // pred_check
          %p143 = pneg %p60
        $region14: #{tpu_custom_call.1} parent=11 // pred_check_branch
          %145 = sbr.rel (%p143) target = $region16
        $region15: #{tpu_custom_call.1} parent=11 // pred_region
          _
        $region16: #{tpu_custom_call.1} parent=11 // pred_fallthru
          _
        // Predicated region
        $region17: #{tpu_custom_call.1} parent=11 // pred_check
          %p146 = pneg %p81
        $region18: #{tpu_custom_call.1} parent=11 // pred_check_branch
          %148 = sbr.rel (%p146) target = $region20
        $region19: #{tpu_custom_call.1} parent=11 // pred_region
          _
        $region20: #{tpu_custom_call.1} parent=11 // pred_fallthru
          _
        // Predicated region
        $region21: #{tpu_custom_call.1} parent=11 // pred_check
          %p149 = pneg %p102
        $region22: #{tpu_custom_call.1} parent=11 // pred_check_branch
          %151 = sbr.rel (%p149) target = $region24
        $region23: #{tpu_custom_call.1} parent=11 // pred_region
          _
        $region24: #{tpu_custom_call.1} parent=11 // pred_fallthru
          _
      $region12: #{tpu_custom_call.1} parent=5 // pred_fallthru
        _
      %p152 = scmp.lt.s32.totalorder %s13, 2
      // Predicated region
      $region25: #{tpu_custom_call.1} parent=5 // pred_check
        %p153 = pneg %p152
      $region26: #{tpu_custom_call.1} parent=5 // pred_check_branch
        %155 = sbr.rel (%p153) target = $region28
      $region27: #{tpu_custom_call.1} parent=5 // pred_region
        // Predicated region
        $region29: #{tpu_custom_call.1} parent=27 // pred_check
          %p156 = pneg %p33
        $region30: #{tpu_custom_call.1} parent=27 // pred_check_branch
          %158 = sbr.rel (%p156) target = $region32
        $region31: #{tpu_custom_call.1} parent=27 // pred_region
          %p159 = scmp.lt.s32.totalorder %s13, 1
          %s160 = scalar_select %p159, %s13, 1
          %s161 = smul.addr %s160, 16
          %s162 = smul.addr %s161, 8
          %s163 = scalar_lea.vmem %s0, %s162
        $region32: #{tpu_custom_call.1} parent=27 // pred_fallthru
          _
      $region28: #{tpu_custom_call.1} parent=5 // pred_fallthru
        _
      %p164 = scmp.le.s32.totalorder 1, %s13
      %p165 = scmp.lt.s32.totalorder %s13, 3
      %p166 = pnand %p164, %p165
      %p167 = pneg %p166
      // Predicated region
      $region33: #{tpu_custom_call.1} parent=5 // pred_check
        _
      $region34: #{tpu_custom_call.1} parent=5 // pred_check_branch
        %169 = sbr.rel (%p166) target = $region36
      $region35: #{tpu_custom_call.1} parent=5 // pred_region
        %s170 = ssub.s32 %s13, 1
        %p171 = scmp.lt.s32.totalorder %s18, 1
        %s172 = scalar_select %p171, %s18, 1
        %s173 = smul.addr %s172, 16
        %s174 = smul.addr %s173, 8
        %s175 = scalar_lea.vmem %s0, %s174
        %p176 = pneg %p39
        %p177 = pneg %p36
        %p178 = pneg %p60
        %p179 = pneg %p57
        %p180 = pneg %p81
        %p181 = pneg %p78
        %p182 = pneg %p102
        %p183 = pneg %p99
        %p184 = pneg %p128
        %p185 = pneg %p125
        %s186 = sand.u32 %s115, 1
        %s187 = scalar_lea.sflag [#allocation3], %s186
        %s188 = sand.u32 %s115, 1
        %s189 = smul.addr %s188, 256
        %s190 = scalar_lea.vmem [#allocation2], %s189
        %p191 = scmp.lt.s32.totalorder %s18, 1
        %s192 = scalar_select %p191, %s18, 1
        %s193 = smul.addr %s192, 16
        %s194 = smul.addr %s193, 8
        %s195 = scalar_lea.vmem %s0, %s194
        %v197 = vld [vmem:[%s195] sm:$0xff]
        %v198 = vld [vmem:[%s195 + $0x8] sm:$0xff]
        %v199 = vld [vmem:[%s195 + $0x10] sm:$0xff]
        %v200 = vld [vmem:[%s195 + $0x18] sm:$0xff]
        %v201 = vld [vmem:[%s195 + $0x20] sm:$0xff]
        %v202 = vld [vmem:[%s195 + $0x28] sm:$0xff]
        %v203 = vld [vmem:[%s195 + $0x30] sm:$0xff]
        %v204 = vld [vmem:[%s195 + $0x38] sm:$0xff]
        %v205 = vld [vmem:[%s195 + $0x40] sm:$0xff]
        %v206 = vld [vmem:[%s195 + $0x48] sm:$0xff]
        %v207 = vld [vmem:[%s195 + $0x50] sm:$0xff]
        %v208 = vld [vmem:[%s195 + $0x58] sm:$0xff]
        %v209 = vld [vmem:[%s195 + $0x60] sm:$0xff]
        %v210 = vld [vmem:[%s195 + $0x68] sm:$0xff]
        %v211 = vld [vmem:[%s195 + $0x70] sm:$0xff]
        %v212 = vld [vmem:[%s195 + $0x78] sm:$0xff]
        %v213 = vpack.c.bf16 %v198, %v197
        %v214 = vpack.c.bf16 %v200, %v199
        %v215 = vpack.c.bf16 %v202, %v201
        %v216 = vpack.c.bf16 %v204, %v203
        %v217 = vpack.c.bf16 %v206, %v205
        %v218 = vpack.c.bf16 %v208, %v207
        %v219 = vpack.c.bf16 %v210, %v209
        %v220 = vpack.c.bf16 %v212, %v211
        %v221 = vld [vmem:[%s1] sm:$0xff]
        %v222 = vld [vmem:[%s1 + $0x8] sm:$0xff]
        %v223 = vld [vmem:[%s1 + $0x10] sm:$0xff]
        %v224 = vld [vmem:[%s1 + $0x18] sm:$0xff]
        %v225 = vld [vmem:[%s1 + $0x20] sm:$0xff]
        %v226 = vld [vmem:[%s1 + $0x28] sm:$0xff]
        %v227 = vld [vmem:[%s1 + $0x30] sm:$0xff]
        %v228 = vld [vmem:[%s1 + $0x38] sm:$0xff]
        %v229 = vld [vmem:[%s2] sm:$0x3]
        %v231 = vperm.slane %v229, 0
        %v232 = vperm.slane %v229, 1
        %v243 = vunpack.c.l.b16 %v221
        %v244 = vunpack.c.h.b16 %v221
        %v245 = vunpack.c.l.b16 %v222
        %v246 = vunpack.c.h.b16 %v222
        %v247 = vunpack.c.l.b16 %v223
        %v248 = vunpack.c.h.b16 %v223
        %v249 = vunpack.c.l.b16 %v224
        %v250 = vunpack.c.h.b16 %v224
        %v251 = vunpack.c.l.b16 %v225
        %v252 = vunpack.c.h.b16 %v225
        %v253 = vunpack.c.l.b16 %v226
        %v254 = vunpack.c.h.b16 %v226
        %v255 = vunpack.c.l.b16 %v227
        %v256 = vunpack.c.h.b16 %v227
        %v257 = vunpack.c.l.b16 %v228
        %v258 = vunpack.c.h.b16 %v228
        %v259 = vpack.c.b16 %v245, %v243
        %v260 = vpack.c.b16 %v246, %v244
        %v261 = vpack.c.b16 %v249, %v247
        %v262 = vpack.c.b16 %v250, %v248
        %v263 = vpack.c.b16 %v253, %v251
        %v264 = vpack.c.b16 %v254, %v252
        %v265 = vpack.c.b16 %v257, %v255
        %v266 = vpack.c.b16 %v258, %v256
        %vm275 = vcmask 523264
        %v277 = vsel %vm275, %v213, 0
        %v280 = vsel %vm275, %v214, 0
        %v283 = vsel %vm275, %v215, 0
        %v286 = vsel %vm275, %v216, 0
        %v289 = vsel %vm275, %v217, 0
        %v292 = vsel %vm275, %v218, 0
        %v295 = vsel %vm275, %v219, 0
        %v298 = vsel %vm275, %v220, 0
        %300 = vmatpush.bf16.msra.mxu0 0
        %301 = vmatpush.bf16.msra.mxu0 0
        %302 = vmatpush.bf16.msra.mxu0 0
        %303 = vmatpush.bf16.msra.mxu0 0
        %304 = vmatpush.bf16.msra.mxu0 %v265
        %305 = vmatpush.bf16.msra.mxu0 %v263
        %306 = vmatpush.bf16.msra.mxu0 %v261
        %307 = vmatpush.bf16.msra.mxu0 %v259
        %308 = vmatmul.bf16.gmra.mxu0 %v277
        %v309 = vpop.f32.mrf.mxu0
        %v310 = vadd.f32 %v231, %v309
        %v311 = vpop.f32.mrf.mxu0
        %v312 = vadd.f32 %v231, %v311
        %313 = vmatmul.bf16.gmra.mxu0 %v280
        %v314 = vpop.f32.mrf.mxu0
        %v315 = vadd.f32 %v231, %v314
        %v316 = vpop.f32.mrf.mxu0
        %v317 = vadd.f32 %v231, %v316
        %318 = vmatmul.bf16.gmra.mxu0 %v283
        %v319 = vpop.f32.mrf.mxu0
        %v320 = vadd.f32 %v231, %v319
        %v321 = vpop.f32.mrf.mxu0
        %v322 = vadd.f32 %v231, %v321
        %323 = vmatmul.bf16.gmra.mxu0 %v286
        %v324 = vpop.f32.mrf.mxu0
        %v325 = vadd.f32 %v231, %v324
        %v326 = vpop.f32.mrf.mxu0
        %v327 = vadd.f32 %v231, %v326
        %328 = vmatmul.bf16.gmra.mxu0 %v289
        %v329 = vpop.f32.mrf.mxu0
        %v330 = vadd.f32 %v231, %v329
        %v331 = vpop.f32.mrf.mxu0
        %v332 = vadd.f32 %v231, %v331
        %333 = vmatmul.bf16.gmra.mxu0 %v292
        %v334 = vpop.f32.mrf.mxu0
        %v335 = vadd.f32 %v231, %v334
        %v336 = vpop.f32.mrf.mxu0
        %v337 = vadd.f32 %v231, %v336
        %338 = vmatmul.bf16.gmra.mxu0 %v295
        %v339 = vpop.f32.mrf.mxu0
        %v340 = vadd.f32 %v231, %v339
        %v341 = vpop.f32.mrf.mxu0
        %v342 = vadd.f32 %v231, %v341
        %343 = vmatmul.bf16.gmra.mxu0 %v298
        %v344 = vpop.f32.mrf.mxu0
        %v345 = vadd.f32 %v231, %v344
        %v346 = vpop.f32.mrf.mxu0
        %v347 = vadd.f32 %v231, %v346
        %348 = vdwg.mxu0
        %349 = vmatpush.bf16.msra.mxu0 0
        %350 = vmatpush.bf16.msra.mxu0 0
        %351 = vmatpush.bf16.msra.mxu0 0
        %352 = vmatpush.bf16.msra.mxu0 0
        %353 = vmatpush.bf16.msra.mxu0 %v266
        %354 = vmatpush.bf16.msra.mxu0 %v264
        %355 = vmatpush.bf16.msra.mxu0 %v262
        %356 = vmatpush.bf16.msra.mxu0 %v260
        %357 = vmatmul.bf16.gmra.mxu0 %v277
        %v358 = vpop.f32.mrf.mxu0
        %v359 = vadd.f32 %v232, %v358
        %v360 = vpop.f32.mrf.mxu0
        %v361 = vadd.f32 %v232, %v360
        %362 = vmatmul.bf16.gmra.mxu0 %v280
        %v363 = vpop.f32.mrf.mxu0
        %v364 = vadd.f32 %v232, %v363
        %v365 = vpop.f32.mrf.mxu0
        %v366 = vadd.f32 %v232, %v365
        %367 = vmatmul.bf16.gmra.mxu0 %v283
        %v368 = vpop.f32.mrf.mxu0
        %v369 = vadd.f32 %v232, %v368
        %v370 = vpop.f32.mrf.mxu0
        %v371 = vadd.f32 %v232, %v370
        %372 = vmatmul.bf16.gmra.mxu0 %v286
        %v373 = vpop.f32.mrf.mxu0
        %v374 = vadd.f32 %v232, %v373
        %v375 = vpop.f32.mrf.mxu0
        %v376 = vadd.f32 %v232, %v375
        %377 = vmatmul.bf16.gmra.mxu0 %v289
        %v378 = vpop.f32.mrf.mxu0
        %v379 = vadd.f32 %v232, %v378
        %v380 = vpop.f32.mrf.mxu0
        %v381 = vadd.f32 %v232, %v380
        %382 = vmatmul.bf16.gmra.mxu0 %v292
        %v383 = vpop.f32.mrf.mxu0
        %v384 = vadd.f32 %v232, %v383
        %v385 = vpop.f32.mrf.mxu0
        %v386 = vadd.f32 %v232, %v385
        %387 = vmatmul.bf16.gmra.mxu0 %v295
        %v388 = vpop.f32.mrf.mxu0
        %v389 = vadd.f32 %v232, %v388
        %v390 = vpop.f32.mrf.mxu0
        %v391 = vadd.f32 %v232, %v390
        %392 = vmatmul.bf16.gmra.mxu0 %v298
        %v393 = vpop.f32.mrf.mxu0
        %v394 = vadd.f32 %v232, %v393
        %v395 = vpop.f32.mrf.mxu0
        %v396 = vadd.f32 %v232, %v395
        %397 = vdwg.mxu0
        %v398 = vld [vmem:[%s3] sm:$0xff]
        %v399 = vld [vmem:[%s3 + $0x8] sm:$0xff]
        %v400 = vld [vmem:[%s3 + $0x10] sm:$0xff]
        %v401 = vld [vmem:[%s3 + $0x18] sm:$0xff]
        %v402 = vld [vmem:[%s3 + $0x20] sm:$0xff]
        %v403 = vld [vmem:[%s3 + $0x28] sm:$0xff]
        %v404 = vld [vmem:[%s3 + $0x30] sm:$0xff]
        %v405 = vld [vmem:[%s3 + $0x38] sm:$0xff]
        %v406 = vld [vmem:[%s3 + $0x40] sm:$0xff]
        %v407 = vld [vmem:[%s3 + $0x48] sm:$0xff]
        %v408 = vld [vmem:[%s3 + $0x50] sm:$0xff]
        %v409 = vld [vmem:[%s3 + $0x58] sm:$0xff]
        %v410 = vld [vmem:[%s3 + $0x60] sm:$0xff]
        %v411 = vld [vmem:[%s3 + $0x68] sm:$0xff]
        %v412 = vld [vmem:[%s3 + $0x70] sm:$0xff]
        %v413 = vld [vmem:[%s3 + $0x78] sm:$0xff]
        %v414 = vld [vmem:[%s3 + $0x80] sm:$0xff]
        %v415 = vld [vmem:[%s3 + $0x88] sm:$0xff]
        %v416 = vld [vmem:[%s3 + $0x90] sm:$0xff]
        %v417 = vld [vmem:[%s3 + $0x98] sm:$0xff]
        %v418 = vld [vmem:[%s3 + $0xa0] sm:$0xff]
        %v419 = vld [vmem:[%s3 + $0xa8] sm:$0xff]
        %v420 = vld [vmem:[%s3 + $0xb0] sm:$0xff]
        %v421 = vld [vmem:[%s3 + $0xb8] sm:$0xff]
        %v422 = vld [vmem:[%s3 + $0xc0] sm:$0xff]
        %v423 = vld [vmem:[%s3 + $0xc8] sm:$0xff]
        %v424 = vld [vmem:[%s3 + $0xd0] sm:$0xff]
        %v425 = vld [vmem:[%s3 + $0xd8] sm:$0xff]
        %v426 = vld [vmem:[%s3 + $0xe0] sm:$0xff]
        %v427 = vld [vmem:[%s3 + $0xe8] sm:$0xff]
        %v428 = vld [vmem:[%s3 + $0xf0] sm:$0xff]
        %v429 = vld [vmem:[%s3 + $0xf8] sm:$0xff]
        %v430 = vadd.f32 %v310, %v398
        %v431 = vadd.f32 %v359, %v399
        %v432 = vadd.f32 %v312, %v400
        %v433 = vadd.f32 %v361, %v401
        %v434 = vadd.f32 %v315, %v402
        %v435 = vadd.f32 %v364, %v403
        %v436 = vadd.f32 %v317, %v404
        %v437 = vadd.f32 %v366, %v405
        %v438 = vadd.f32 %v320, %v406
        %v439 = vadd.f32 %v369, %v407
        %v440 = vadd.f32 %v322, %v408
        %v441 = vadd.f32 %v371, %v409
        %v442 = vadd.f32 %v325, %v410
        %v443 = vadd.f32 %v374, %v411
        %v444 = vadd.f32 %v327, %v412
        %v445 = vadd.f32 %v376, %v413
        %v446 = vadd.f32 %v330, %v414
        %v447 = vadd.f32 %v379, %v415
        %v448 = vadd.f32 %v332, %v416
        %v449 = vadd.f32 %v381, %v417
        %v450 = vadd.f32 %v335, %v418
        %v451 = vadd.f32 %v384, %v419
        %v452 = vadd.f32 %v337, %v420
        %v453 = vadd.f32 %v386, %v421
        %v454 = vadd.f32 %v340, %v422
        %v455 = vadd.f32 %v389, %v423
        %v456 = vadd.f32 %v342, %v424
        %v457 = vadd.f32 %v391, %v425
        %v458 = vadd.f32 %v345, %v426
        %v459 = vadd.f32 %v394, %v427
        %v460 = vadd.f32 %v347, %v428
        %v461 = vadd.f32 %v396, %v429
        %462 = vst [vmem:[%s190] sm:$0xff] %v430
        %463 = vst [vmem:[%s190 + $0x8] sm:$0xff] %v431
        %464 = vst [vmem:[%s190 + $0x10] sm:$0xff] %v432
        %465 = vst [vmem:[%s190 + $0x18] sm:$0xff] %v433
        %466 = vst [vmem:[%s190 + $0x20] sm:$0xff] %v434
        %467 = vst [vmem:[%s190 + $0x28] sm:$0xff] %v435
        %468 = vst [vmem:[%s190 + $0x30] sm:$0xff] %v436
        %469 = vst [vmem:[%s190 + $0x38] sm:$0xff] %v437
        %470 = vst [vmem:[%s190 + $0x40] sm:$0xff] %v438
        %471 = vst [vmem:[%s190 + $0x48] sm:$0xff] %v439
        %472 = vst [vmem:[%s190 + $0x50] sm:$0xff] %v440
        %473 = vst [vmem:[%s190 + $0x58] sm:$0xff] %v441
        %474 = vst [vmem:[%s190 + $0x60] sm:$0xff] %v442
        %475 = vst [vmem:[%s190 + $0x68] sm:$0xff] %v443
        %476 = vst [vmem:[%s190 + $0x70] sm:$0xff] %v444
        %477 = vst [vmem:[%s190 + $0x78] sm:$0xff] %v445
        %478 = vst [vmem:[%s190 + $0x80] sm:$0xff] %v446
        %479 = vst [vmem:[%s190 + $0x88] sm:$0xff] %v447
        %480 = vst [vmem:[%s190 + $0x90] sm:$0xff] %v448
        %481 = vst [vmem:[%s190 + $0x98] sm:$0xff] %v449
        %482 = vst [vmem:[%s190 + $0xa0] sm:$0xff] %v450
        %483 = vst [vmem:[%s190 + $0xa8] sm:$0xff] %v451
        %484 = vst [vmem:[%s190 + $0xb0] sm:$0xff] %v452
        %485 = vst [vmem:[%s190 + $0xb8] sm:$0xff] %v453
        %486 = vst [vmem:[%s190 + $0xc0] sm:$0xff] %v454
        %487 = vst [vmem:[%s190 + $0xc8] sm:$0xff] %v455
        %488 = vst [vmem:[%s190 + $0xd0] sm:$0xff] %v456
        %489 = vst [vmem:[%s190 + $0xd8] sm:$0xff] %v457
        %490 = vst [vmem:[%s190 + $0xe0] sm:$0xff] %v458
        %491 = vst [vmem:[%s190 + $0xe8] sm:$0xff] %v459
        %492 = vst [vmem:[%s190 + $0xf0] sm:$0xff] %v460
        %493 = vst [vmem:[%s190 + $0xf8] sm:$0xff] %v461
        %s494 = sand.u32 %s115, 1
        %s495 = scalar_lea.sflag [#allocation3], %s494
        %s496 = sand.u32 %s115, 1
        %s497 = smul.addr %s496, 256
        %s498 = scalar_lea.vmem [#allocation2], %s497
        // Predicated region
        $region37: #{tpu_custom_call.1} parent=35 // pred_check
          %p499 = pneg %p125
        $region38: #{tpu_custom_call.1} parent=35 // pred_check_branch
          %501 = sbr.rel (%p499) target = $region40
        $region39: #{tpu_custom_call.1} parent=35 // pred_region
          %503 = vsyncadd %s495, 0
          %s504 = smul.addr %s18, 32
          %s505 = smul.addr %s504, 8
          %s506 = scalar_lea.hbm %s4, %s505
          %s507 = sshll.u32 %s498, 4
          %s508 = int_to_ptr.vmem [resolvable:$true] %s507
          %s509 = sshll.u32 %s506, 4
          %s510 = int_to_ptr.hbm [resolvable:$true] %s509
          %515 = dma.vmem_to_hbm [thread:$0]  %s508, 4096, %s510, %s495, 256, 256, 16
        $region40: #{tpu_custom_call.1} parent=35 // pred_fallthru
          _
      $region36: #{tpu_custom_call.1} parent=5 // pred_fallthru
        _
      %p516 = scmp.le.s32.totalorder 2, %s13
      // Predicated region
      $region41: #{tpu_custom_call.1} parent=5 // pred_check
        %p517 = pneg %p516
      $region42: #{tpu_custom_call.1} parent=5 // pred_check_branch
        %519 = sbr.rel (%p517) target = $region44
      $region43: #{tpu_custom_call.1} parent=5 // pred_region
        %s520 = ssub.s32 %s13, 2
        // Predicated region
        $region45: #{tpu_custom_call.1} parent=43 // pred_check
          %p521 = pneg %p131
        $region46: #{tpu_custom_call.1} parent=43 // pred_check_branch
          %523 = sbr.rel (%p521) target = $region48
        $region47: #{tpu_custom_call.1} parent=43 // pred_region
          %s524 = sand.u32 %s116, 1
          %s525 = scalar_lea.sflag [#allocation3], %s524
          %s526 = sand.u32 %s116, 1
          %s527 = smul.addr %s526, 256
          %s528 = scalar_lea.vmem [#allocation2], %s527
          %530 = dma.done %s525, 4096
        $region48: #{tpu_custom_call.1} parent=43 // pred_fallthru
          _
      $region44: #{tpu_custom_call.1} parent=5 // pred_fallthru
        _
    $region6: #{tpu_custom_call.1} parent=1 // loop_footer
      %s17 = sadd.s32 1, %s13
    $region7: #{tpu_custom_call.1} parent=1 // loop_footer_branch
      %12 = sbr.rel target = $region3
    $region8: #{tpu_custom_call.1} parent=1 // loop_exit
      _
    %531 = vsyncpa [#allocation3], 1
    %s532 = scalar_lea.sflag [#allocation3], 1
    %533 = vsyncpa %s532, 1

</llo_original>
